<compile_context>
chip_gen: v5e
topology: v5e:2x2
jax: 0.10.0
libtpu: 0.0.40
codegen_flags: <defaults>
</compile_context>

<pallas_src>
import jax
import jax.numpy as jnp
from jax.experimental import pallas as pl
from jax.experimental.pallas import tpu as pltpu


def _gnn_ebm_kernel(x1_ref, x2_ref, ssumT_ref, s0_ref, s1_ref,
                    wn_ref, qh_ref, bn_ref,
                    we4_ref, wi_ref, wj_ref, be_ref,
                    x_out_ref, e_out_ref):
    """One batch element per grid step.

    x1_ref : (1, T, 2d)    channel-in-lane-block layout ([neg | pos])
    x2_ref : (1, M, 4d)    ([c0 | c1 | c2 | c3])
    ssumT  : (T, M)        (one_hot(edge0) + one_hot(edge1))^T   -- scatter-add
    s0,s1  : (M, T)        one_hot(edge0), one_hot(edge1)        -- gathers
    wn_ref : (2d, 2d_out)  blockdiag(node_w.T, node_w.T)
    qh_ref : (4d, 2d_out)  0.5 * [[Wn,0],[Wn,0],[0,Wn],[0,Wn]]  (agg + /2 + node layer)
    bn_ref : (1, 2d_out)   [node_b | node_b]
    we4_ref: (4d, 4d_out)  blockdiag(edge_w.T x 4)
    wi_ref : (2d, 4d_out)  [[A,A,0,0],[0,0,A,A]],  A = mlp_w.T @ edge_w.T
    wj_ref : (2d, 4d_out)  [[A,0,A,0],[0,A,0,A]]
    be_ref : (1, 4d_out)   tile(mlp_b @ edge_w.T + edge_b, 4)
    """
    x1 = x1_ref[0]          # (T, 2d)
    x2 = x2_ref[0]          # (M, 4d)

    # ---- node branch -------------------------------------------------------
    # Per-channel scatter-add of all 4 second-order channels in one wide matmul.
    u4 = jnp.dot(ssumT_ref[...], x2, preferred_element_type=jnp.float32)      # (T, 4d)
    # node_layer(x_1st + 0.5*(scatter0+scatter1)(agg)) for both channels at once.
    node = (jnp.dot(x1, wn_ref[...], preferred_element_type=jnp.float32)
            + jnp.dot(u4, qh_ref[...], preferred_element_type=jnp.float32)
            + bn_ref[...])                                                    # (T, 2*d_out)
    x_out_ref[0] = node

    # ---- edge branch -------------------------------------------------------
    # mlp/edge_layer pre-composed and replicated per channel pattern; applied on
    # T node rows, then gathered to edges with one-hot matmuls.
    zi = jnp.dot(x1, wi_ref[...], preferred_element_type=jnp.float32)         # (T, 4*d_out)
    zj = jnp.dot(x1, wj_ref[...], preferred_element_type=jnp.float32)         # (T, 4*d_out)
    e = (jnp.dot(x2, we4_ref[...], preferred_element_type=jnp.float32)        # edge_layer(x_2nd)
         + jnp.dot(s0_ref[...], zi, preferred_element_type=jnp.float32)       # edge_layer(mlp(edge_i))
         + jnp.dot(s1_ref[...], zj, preferred_element_type=jnp.float32)       # edge_layer(mlp(edge_j))
         + be_ref[...])                                                       # (M, 4*d_out)
    e_out_ref[0] = e


@jax.jit
def gnn_ebm_layer_forward(x_1st, x_2nd, edge, params):
    """params: PyTorch Linear layout, weights (out_dim, in_dim), biases (out_dim,)."""
    B, T, _, d = x_1st.shape
    _, M, _, _ = x_2nd.shape
    d_out = params["node_w"].shape[0]
    # The module adds x_2nd to the mlp output, so input_dim must equal output_dim.
    assert d == d_out, "GNN_EBM_Layer_01 requires input_dim == output_dim"

    f32 = jnp.float32

    # --- glue built once per call (tiny, plain JAX) --------------------------
    s0 = jax.nn.one_hot(edge[0], T, dtype=f32)                 # (M, T)
    s1 = jax.nn.one_hot(edge[1], T, dtype=f32)                 # (M, T)
    ssumT = (s0 + s1).T                                        # (T, M)

    wnT = params["node_w"].T.astype(f32)                       # (d, d_out)
    wmT = params["mlp_w"].T.astype(f32)                        # (d, d_out)
    weT = params["edge_w"].T.astype(f32)                       # (d, d_out)
    bn = params["node_b"].astype(f32)
    bm = params["mlp_b"].astype(f32)
    be = params["edge_b"].astype(f32)

    z = jnp.zeros((d, d_out), f32)
    # node_layer over both channels at once.
    wn_bd = jnp.block([[wnT, z], [z, wnT]])                    # (2d, 2d_out)
    # channel aggregation ([0,0,1,1]) + /2 + node_layer, applied to scatter result.
    qh = 0.5 * jnp.block([[wnT, z], [wnT, z], [z, wnT], [z, wnT]])   # (4d, 2d_out)
    bn_cat = jnp.tile(bn.reshape(1, d_out), (1, 2))            # (1, 2*d_out)

    # edge branch: fold mlp into edge_layer, replicate per channel pattern.
    A = wmT @ weT                                              # (d, d_out)
    we_bd4 = jnp.block([[weT, z, z, z], [z, weT, z, z],
                        [z, z, weT, z], [z, z, z, weT]])       # (4d, 4*d_out)
    wi_full = jnp.block([[A, A, z, z], [z, z, A, A]])          # node_i channels [0,0,1,1]
    wj_full = jnp.block([[A, z, A, z], [z, A, z, A]])          # node_j channels [0,1,0,1]
    be_cat = jnp.tile((bm @ weT + be).reshape(1, d_out), (1, 4))   # (1, 4*d_out)

    # Channel-in-lane-block layout (free reshapes, no transpose).
    x1c = x_1st.reshape(B, T, 2 * d)
    x2c = x_2nd.reshape(B, M, 4 * d)

    full2 = lambda r, c: pl.BlockSpec((r, c), lambda b: (0, 0))

    out_shapes = (
        jax.ShapeDtypeStruct((B, T, 2 * d_out), f32),
        jax.ShapeDtypeStruct((B, M, 4 * d_out), f32),
    )

    x_out_cat, e_out_cat = pl.pallas_call(
        _gnn_ebm_kernel,
        out_shape=out_shapes,
        grid_spec=pltpu.PrefetchScalarGridSpec(
            num_scalar_prefetch=0,
            grid=(B,),
            in_specs=[
                pl.BlockSpec((1, T, 2 * d), lambda b: (b, 0, 0)),     # x_1st (flat channels)
                pl.BlockSpec((1, M, 4 * d), lambda b: (b, 0, 0)),     # x_2nd (flat channels)
                full2(T, M),                                          # (S0+S1)^T
                full2(M, T),                                          # S0
                full2(M, T),                                          # S1
                full2(2 * d, 2 * d_out),                              # Wn blockdiag
                full2(4 * d, 2 * d_out),                              # Qh
                full2(1, 2 * d_out),                                  # node bias (cat)
                full2(4 * d, 4 * d_out),                              # We blockdiag x4
                full2(2 * d, 4 * d_out),                              # Wi (mlp∘edge, node_i)
                full2(2 * d, 4 * d_out),                              # Wj (mlp∘edge, node_j)
                full2(1, 4 * d_out),                                  # edge bias (cat)
            ],
            out_specs=[
                pl.BlockSpec((1, T, 2 * d_out), lambda b: (b, 0, 0)),
                pl.BlockSpec((1, M, 4 * d_out), lambda b: (b, 0, 0)),
            ],
        ),
        compiler_params=pltpu.CompilerParams(
            dimension_semantics=("parallel",)),
    )(x1c, x2c, ssumT, s0, s1,
      wn_bd, qh, bn_cat, we_bd4, wi_full, wj_full, be_cat)

    return (x_out_cat.reshape(B, T, 2, d_out),
            e_out_cat.reshape(B, M, 4, d_out))


def reference_forward(x_1st, x_2nd, edge, params):
    """Pure-JAX reference matching the PyTorch module semantics."""
    node_in, node_out = edge[0], edge[1]
    agg = jnp.stack([x_2nd[:, :, 0] + x_2nd[:, :, 1],
                     x_2nd[:, :, 2] + x_2nd[:, :, 3]], axis=2)   # (B, M, 2, d)

    def mp(xn, x2n):
        z = jnp.zeros_like(xn)
        upd = (z.at[:, node_out].add(x2n) + z.at[:, node_in].add(x2n)) / 2.0
        return xn + upd

    x_neg = mp(x_1st[:, :, 0], agg[:, :, 0])
    x_pos = mp(x_1st[:, :, 1], agg[:, :, 1])
    x = jnp.stack([x_neg, x_pos], axis=2)
    x = x @ params["node_w"].T + params["node_b"]

    ii = jnp.array([0, 0, 1, 1])
    jj = jnp.array([0, 1, 0, 1])
    edge_i = x_1st[:, node_in][:, :, ii]
    edge_j = x_1st[:, node_out][:, :, jj]
    e = x_2nd + (edge_i + edge_j) @ params["mlp_w"].T + params["mlp_b"]
    e = e @ params["edge_w"].T + params["edge_b"]
    return x, e


if __name__ == "__main__":
    # Small demo shapes; the module requires d == d_out.
    B, T, M, d = 2, 8, 12, 32
    d_out = d

    key = jax.random.PRNGKey(0)
    k1, k2, k3, kw1, kw2, kw3, kb1, kb2, kb3 = jax.random.split(key, 9)

    x_1st = jax.random.normal(k1, (B, T, 2, d), dtype=jnp.float32)
    x_2nd = jax.random.normal(k2, (B, M, 4, d), dtype=jnp.float32)
    edge = jax.random.randint(k3, (2, M), 0, T, dtype=jnp.int32)

    params = {
        "node_w": 0.1 * jax.random.normal(kw1, (d_out, d), dtype=jnp.float32),
        "node_b": 0.1 * jax.random.normal(kb1, (d_out,), dtype=jnp.float32),
        "mlp_w": 0.1 * jax.random.normal(kw2, (d_out, d), dtype=jnp.float32),
        "mlp_b": 0.1 * jax.random.normal(kb2, (d_out,), dtype=jnp.float32),
        "edge_w": 0.1 * jax.random.normal(kw3, (d_out, d), dtype=jnp.float32),
        "edge_b": 0.1 * jax.random.normal(kb3, (d_out,), dtype=jnp.float32),
    }

    x_out, edge_out = gnn_ebm_layer_forward(x_1st, x_2nd, edge, params)
    jax.block_until_ready((x_out, edge_out))

    x_ref, edge_ref = reference_forward(x_1st, x_2nd, edge, params)
    assert x_out.shape == (B, T, 2, d_out) and edge_out.shape == (B, M, 4, d_out)
    assert jnp.allclose(x_out, x_ref, atol=1e-4, rtol=1e-4)
    assert jnp.allclose(edge_out, edge_ref, atol=1e-4, rtol=1e-4)

    print("KERNEL_OK")
</pallas_src>

<mosaic_0001>
module attributes {stable_mosaic.version = 11 : i64} {
  func.func @_gnn_ebm_kernel(%arg0: i32, %arg1: memref<1x8x64xf32, #tpu.memory_space<vmem>>, %arg2: memref<1x12x128xf32, #tpu.memory_space<vmem>>, %arg3: memref<8x12xf32, #tpu.memory_space<vmem>>, %arg4: memref<12x8xf32, #tpu.memory_space<vmem>>, %arg5: memref<12x8xf32, #tpu.memory_space<vmem>>, %arg6: memref<64x64xf32, #tpu.memory_space<vmem>>, %arg7: memref<128x64xf32, #tpu.memory_space<vmem>>, %arg8: memref<1x64xf32, #tpu.memory_space<vmem>>, %arg9: memref<128x128xf32, #tpu.memory_space<vmem>>, %arg10: memref<64x128xf32, #tpu.memory_space<vmem>>, %arg11: memref<64x128xf32, #tpu.memory_space<vmem>>, %arg12: memref<1x128xf32, #tpu.memory_space<vmem>>, %arg13: memref<1x8x64xf32, #tpu.memory_space<vmem>>, %arg14: memref<1x12x128xf32, #tpu.memory_space<vmem>>) attributes {dimension_semantics = [#tpu.dimension_semantics<parallel>], iteration_bounds = array<i64: 2>, scalar_prefetch = 0 : i64, scratch_operands = 0 : i64, tpu.core_type = #tpu.core_type<tc>, window_params = [{transform_indices = @transform_0, window_bounds = array<i64: 1, 8, 64>}, {transform_indices = @transform_1, window_bounds = array<i64: 1, 12, 128>}, {pipeline_mode = #tpu.pipeline_mode<synchronous>, transform_indices = @transform_2, window_bounds = array<i64: 8, 12>}, {pipeline_mode = #tpu.pipeline_mode<synchronous>, transform_indices = @transform_3, window_bounds = array<i64: 12, 8>}, {pipeline_mode = #tpu.pipeline_mode<synchronous>, transform_indices = @transform_4, window_bounds = array<i64: 12, 8>}, {pipeline_mode = #tpu.pipeline_mode<synchronous>, transform_indices = @transform_5, window_bounds = array<i64: 64, 64>}, {pipeline_mode = #tpu.pipeline_mode<synchronous>, transform_indices = @transform_6, window_bounds = array<i64: 128, 64>}, {pipeline_mode = #tpu.pipeline_mode<synchronous>, transform_indices = @transform_7, window_bounds = array<i64: 1, 64>}, {pipeline_mode = #tpu.pipeline_mode<synchronous>, transform_indices = @transform_8, window_bounds = array<i64: 128, 128>}, {pipeline_mode = #tpu.pipeline_mode<synchronous>, transform_indices = @transform_9, window_bounds = array<i64: 64, 128>}, {pipeline_mode = #tpu.pipeline_mode<synchronous>, transform_indices = @transform_10, window_bounds = array<i64: 64, 128>}, {pipeline_mode = #tpu.pipeline_mode<synchronous>, transform_indices = @transform_11, window_bounds = array<i64: 1, 128>}, {transform_indices = @transform_12, window_bounds = array<i64: 1, 8, 64>}, {transform_indices = @transform_13, window_bounds = array<i64: 1, 12, 128>}]} {
    %c0 = arith.constant 0 : index
    %c0_0 = arith.constant 0 : index
    %c0_1 = arith.constant 0 : index
    %0 = vector.load %arg1[%c0, %c0_0, %c0_1] : memref<1x8x64xf32, #tpu.memory_space<vmem>>, vector<1x8x64xf32>
    %1 = vector.shape_cast %0 : vector<1x8x64xf32> to vector<8x64xf32>
    %c0_2 = arith.constant 0 : index
    %c0_3 = arith.constant 0 : index
    %c0_4 = arith.constant 0 : index
    %2 = vector.load %arg2[%c0_2, %c0_3, %c0_4] : memref<1x12x128xf32, #tpu.memory_space<vmem>>, vector<1x12x128xf32>
    %3 = vector.shape_cast %2 : vector<1x12x128xf32> to vector<12x128xf32>
    %c0_5 = arith.constant 0 : index
    %c0_6 = arith.constant 0 : index
    %4 = vector.load %arg3[%c0_5, %c0_6] : memref<8x12xf32, #tpu.memory_space<vmem>>, vector<8x12xf32>
    %cst = arith.constant dense<0.000000e+00> : vector<8x128xf32>
    %5 = tpu.matmul %4, %3, %cst {dimension_numbers = #tpu.dot_dimension_numbers<[1], [0], [0], [1], [0, 0, 1, 1], [], []>} : vector<8x12xf32>, vector<12x128xf32>, vector<8x128xf32> -> vector<8x128xf32>
    %c0_7 = arith.constant 0 : index
    %c0_8 = arith.constant 0 : index
    %6 = vector.load %arg6[%c0_7, %c0_8] : memref<64x64xf32, #tpu.memory_space<vmem>>, vector<64x64xf32>
    %cst_9 = arith.constant dense<0.000000e+00> : vector<8x64xf32>
    %7 = tpu.matmul %1, %6, %cst_9 {dimension_numbers = #tpu.dot_dimension_numbers<[1], [0], [0], [1], [0, 0, 1, 1], [], []>} : vector<8x64xf32>, vector<64x64xf32>, vector<8x64xf32> -> vector<8x64xf32>
    %c0_10 = arith.constant 0 : index
    %c0_11 = arith.constant 0 : index
    %8 = vector.load %arg7[%c0_10, %c0_11] : memref<128x64xf32, #tpu.memory_space<vmem>>, vector<128x64xf32>
    %cst_12 = arith.constant dense<0.000000e+00> : vector<8x64xf32>
    %9 = tpu.matmul %5, %8, %cst_12 {dimension_numbers = #tpu.dot_dimension_numbers<[1], [0], [0], [1], [0, 0, 1, 1], [], []>} : vector<8x128xf32>, vector<128x64xf32>, vector<8x64xf32> -> vector<8x64xf32>
    %10 = arith.addf %7, %9 : vector<8x64xf32>
    %c0_13 = arith.constant 0 : index
    %c0_14 = arith.constant 0 : index
    %11 = vector.load %arg8[%c0_13, %c0_14] : memref<1x64xf32, #tpu.memory_space<vmem>>, vector<1x64xf32>
    %12 = vector.broadcast %11 : vector<1x64xf32> to vector<8x64xf32>
    %13 = arith.addf %10, %12 : vector<8x64xf32>
    %c0_15 = arith.constant 0 : index
    %c0_16 = arith.constant 0 : index
    %c0_17 = arith.constant 0 : index
    %14 = vector.load %arg13[%c0_15, %c0_16, %c0_17] : memref<1x8x64xf32, #tpu.memory_space<vmem>>, vector<1x8x64xf32>
    %15 = vector.shape_cast %14 : vector<1x8x64xf32> to vector<8x64xf32>
    %16 = vector.shape_cast %13 : vector<8x64xf32> to vector<1x8x64xf32>
    tpu.vector_store %arg13[%c0_15, %c0_16, %c0_17], %16 {strides = array<i32>} : memref<1x8x64xf32, #tpu.memory_space<vmem>>, vector<1x8x64xf32>,
    %c0_18 = arith.constant 0 : index
    %c0_19 = arith.constant 0 : index
    %17 = vector.load %arg10[%c0_18, %c0_19] : memref<64x128xf32, #tpu.memory_space<vmem>>, vector<64x128xf32>
    %cst_20 = arith.constant dense<0.000000e+00> : vector<8x128xf32>
    %18 = tpu.matmul %1, %17, %cst_20 {dimension_numbers = #tpu.dot_dimension_numbers<[1], [0], [0], [1], [0, 0, 1, 1], [], []>} : vector<8x64xf32>, vector<64x128xf32>, vector<8x128xf32> -> vector<8x128xf32>
    %c0_21 = arith.constant 0 : index
    %c0_22 = arith.constant 0 : index
    %19 = vector.load %arg11[%c0_21, %c0_22] : memref<64x128xf32, #tpu.memory_space<vmem>>, vector<64x128xf32>
    %cst_23 = arith.constant dense<0.000000e+00> : vector<8x128xf32>
    %20 = tpu.matmul %1, %19, %cst_23 {dimension_numbers = #tpu.dot_dimension_numbers<[1], [0], [0], [1], [0, 0, 1, 1], [], []>} : vector<8x64xf32>, vector<64x128xf32>, vector<8x128xf32> -> vector<8x128xf32>
    %c0_24 = arith.constant 0 : index
    %c0_25 = arith.constant 0 : index
    %21 = vector.load %arg9[%c0_24, %c0_25] : memref<128x128xf32, #tpu.memory_space<vmem>>, vector<128x128xf32>
    %cst_26 = arith.constant dense<0.000000e+00> : vector<12x128xf32>
    %22 = tpu.matmul %3, %21, %cst_26 {dimension_numbers = #tpu.dot_dimension_numbers<[1], [0], [0], [1], [0, 0, 1, 1], [], []>} : vector<12x128xf32>, vector<128x128xf32>, vector<12x128xf32> -> vector<12x128xf32>
    %c0_27 = arith.constant 0 : index
    %c0_28 = arith.constant 0 : index
    %23 = vector.load %arg4[%c0_27, %c0_28] : memref<12x8xf32, #tpu.memory_space<vmem>>, vector<12x8xf32>
    %cst_29 = arith.constant dense<0.000000e+00> : vector<12x128xf32>
    %24 = tpu.matmul %23, %18, %cst_29 {dimension_numbers = #tpu.dot_dimension_numbers<[1], [0], [0], [1], [0, 0, 1, 1], [], []>} : vector<12x8xf32>, vector<8x128xf32>, vector<12x128xf32> -> vector<12x128xf32>
    %25 = arith.addf %22, %24 : vector<12x128xf32>
    %c0_30 = arith.constant 0 : index
    %c0_31 = arith.constant 0 : index
    %26 = vector.load %arg5[%c0_30, %c0_31] : memref<12x8xf32, #tpu.memory_space<vmem>>, vector<12x8xf32>
    %cst_32 = arith.constant dense<0.000000e+00> : vector<12x128xf32>
    %27 = tpu.matmul %26, %20, %cst_32 {dimension_numbers = #tpu.dot_dimension_numbers<[1], [0], [0], [1], [0, 0, 1, 1], [], []>} : vector<12x8xf32>, vector<8x128xf32>, vector<12x128xf32> -> vector<12x128xf32>
    %28 = arith.addf %25, %27 : vector<12x128xf32>
    %c0_33 = arith.constant 0 : index
    %c0_34 = arith.constant 0 : index
    %29 = vector.load %arg12[%c0_33, %c0_34] : memref<1x128xf32, #tpu.memory_space<vmem>>, vector<1x128xf32>
    %30 = vector.broadcast %29 : vector<1x128xf32> to vector<12x128xf32>
    %31 = arith.addf %28, %30 : vector<12x128xf32>
    %c0_35 = arith.constant 0 : index
    %c0_36 = arith.constant 0 : index
    %c0_37 = arith.constant 0 : index
    %32 = vector.load %arg14[%c0_35, %c0_36, %c0_37] : memref<1x12x128xf32, #tpu.memory_space<vmem>>, vector<1x12x128xf32>
    %33 = vector.shape_cast %32 : vector<1x12x128xf32> to vector<12x128xf32>
    %34 = vector.shape_cast %31 : vector<12x128xf32> to vector<1x12x128xf32>
    tpu.vector_store %arg14[%c0_35, %c0_36, %c0_37], %34 {strides = array<i32>} : memref<1x12x128xf32, #tpu.memory_space<vmem>>, vector<1x12x128xf32>,
    return
  }
  func.func @transform_0(%arg0: i32) -> (i32, i32, i32) {
    %c0_i32 = arith.constant 0 : i32
    %c0_i32_0 = arith.constant 0 : i32
    %c0_i32_1 = arith.constant 0 : i32
    return %arg0, %c0_i32, %c0_i32_0 : i32, i32, i32
  }
  func.func @transform_1(%arg0: i32) -> (i32, i32, i32) {
    %c0_i32 = arith.constant 0 : i32
    %c0_i32_0 = arith.constant 0 : i32
    %c0_i32_1 = arith.constant 0 : i32
    return %arg0, %c0_i32, %c0_i32_0 : i32, i32, i32
  }
  func.func @transform_2(%arg0: i32) -> (i32, i32) {
    %c0_i32 = arith.constant 0 : i32
    %c0_i32_0 = arith.constant 0 : i32
    %c0_i32_1 = arith.constant 0 : i32
    return %c0_i32, %c0_i32_0 : i32, i32
  }
  func.func @transform_3(%arg0: i32) -> (i32, i32) {
    %c0_i32 = arith.constant 0 : i32
    %c0_i32_0 = arith.constant 0 : i32
    %c0_i32_1 = arith.constant 0 : i32
    return %c0_i32, %c0_i32_0 : i32, i32
  }
  func.func @transform_4(%arg0: i32) -> (i32, i32) {
    %c0_i32 = arith.constant 0 : i32
    %c0_i32_0 = arith.constant 0 : i32
    %c0_i32_1 = arith.constant 0 : i32
    return %c0_i32, %c0_i32_0 : i32, i32
  }
  func.func @transform_5(%arg0: i32) -> (i32, i32) {
    %c0_i32 = arith.constant 0 : i32
    %c0_i32_0 = arith.constant 0 : i32
    %c0_i32_1 = arith.constant 0 : i32
    return %c0_i32, %c0_i32_0 : i32, i32
  }
  func.func @transform_6(%arg0: i32) -> (i32, i32) {
    %c0_i32 = arith.constant 0 : i32
    %c0_i32_0 = arith.constant 0 : i32
    %c0_i32_1 = arith.constant 0 : i32
    return %c0_i32, %c0_i32_0 : i32, i32
  }
  func.func @transform_7(%arg0: i32) -> (i32, i32) {
    %c0_i32 = arith.constant 0 : i32
    %c0_i32_0 = arith.constant 0 : i32
    %c0_i32_1 = arith.constant 0 : i32
    return %c0_i32, %c0_i32_0 : i32, i32
  }
  func.func @transform_8(%arg0: i32) -> (i32, i32) {
    %c0_i32 = arith.constant 0 : i32
    %c0_i32_0 = arith.constant 0 : i32
    %c0_i32_1 = arith.constant 0 : i32
    return %c0_i32, %c0_i32_0 : i32, i32
  }
  func.func @transform_9(%arg0: i32) -> (i32, i32) {
    %c0_i32 = arith.constant 0 : i32
    %c0_i32_0 = arith.constant 0 : i32
    %c0_i32_1 = arith.constant 0 : i32
    return %c0_i32, %c0_i32_0 : i32, i32
  }
  func.func @transform_10(%arg0: i32) -> (i32, i32) {
    %c0_i32 = arith.constant 0 : i32
    %c0_i32_0 = arith.constant 0 : i32
    %c0_i32_1 = arith.constant 0 : i32
    return %c0_i32, %c0_i32_0 : i32, i32
  }
  func.func @transform_11(%arg0: i32) -> (i32, i32) {
    %c0_i32 = arith.constant 0 : i32
    %c0_i32_0 = arith.constant 0 : i32
    %c0_i32_1 = arith.constant 0 : i32
    return %c0_i32, %c0_i32_0 : i32, i32
  }
  func.func @transform_12(%arg0: i32) -> (i32, i32, i32) {
    %c0_i32 = arith.constant 0 : i32
    %c0_i32_0 = arith.constant 0 : i32
    %c0_i32_1 = arith.constant 0 : i32
    return %arg0, %c0_i32, %c0_i32_0 : i32, i32, i32
  }
  func.func @transform_13(%arg0: i32) -> (i32, i32, i32) {
    %c0_i32 = arith.constant 0 : i32
    %c0_i32_0 = arith.constant 0 : i32
    %c0_i32_1 = arith.constant 0 : i32
    return %arg0, %c0_i32, %c0_i32_0 : i32, i32, i32
  }
}

</mosaic_0001>

<llo_original>
// kernel: gnn_ebm_layer_forward.1
$region0: #{gnn_ebm_layer_forward.1}
  #allocation0 [shape = 'u32[]', space=smem, size = 0x4, offset = 0x4, fixed_abs, tag = 'smem constant byte address 0x4 - core index']
  #allocation1 [shape = 'u32[72,128]{1,0:T(1,128)}', space=vmem, size = 0x9000, scoped, tag = 'internal scratch']
  %s0 = inlined_call_operand.vmem [shape: f32[2,8,64], index: 0, kind: input, shape index: {}]
  %s1 = inlined_call_operand.vmem [shape: f32[2,12,128], index: 1, kind: input, shape index: {}]
  %s2 = inlined_call_operand.vmem [shape: f32[8,12], index: 2, kind: input, shape index: {}]
  %s3 = inlined_call_operand.vmem [shape: f32[12,8], index: 3, kind: input, shape index: {}]
  %s4 = inlined_call_operand.vmem [shape: f32[12,8], index: 4, kind: input, shape index: {}]
  %s5 = inlined_call_operand.vmem [shape: f32[64,64], index: 5, kind: input, shape index: {}]
  %s6 = inlined_call_operand.vmem [shape: f32[128,64], index: 6, kind: input, shape index: {}]
  %s7 = inlined_call_operand.vmem [shape: f32[1,64], index: 7, kind: input, shape index: {}]
  %s8 = inlined_call_operand.vmem [shape: f32[128,128], index: 8, kind: input, shape index: {}]
  %s9 = inlined_call_operand.vmem [shape: f32[64,128], index: 9, kind: input, shape index: {}]
  %s10 = inlined_call_operand.vmem [shape: f32[64,128], index: 10, kind: input, shape index: {}]
  %s11 = inlined_call_operand.vmem [shape: f32[1,128], index: 11, kind: input, shape index: {}]
  %s12 = inlined_call_operand.vmem [shape: f32[2,8,64], index: 12, kind: output, shape index: {0}]
  %s13 = inlined_call_operand.vmem [shape: f32[2,12,128], index: 13, kind: output, shape index: {1}]
  %14 = xla_tuple %s12, %s13
  %s15 = sld [smem:[#allocation0]]
  $region89: #{gnn_ebm_layer_forward.1} parent=0
    _
  %s17 = ssub.s32 1, %s15
  %s18 = scalar_select 0, %s17, %s15
  loop: start=0, step=1, limit=4
  $region2: #{gnn_ebm_layer_forward.1} parent=0 // loop_pre_header
    _
  $region3: #{gnn_ebm_layer_forward.1} parent=0 // loop_header
    %s20 = sphi 0, %s24
    %p21 = scmp.ge.s32.totalorder %s20, 4
    %s30 = sphi 0, %s32
    %s33 = sphi 0, %s30
    %s34 = sphi 0, %s33
    %s50 = sphi 0, %s34
    %s56 = sphi 0, %s58
    %s59 = sphi 0, %s56
    %s60 = sphi 0, %s59
    %s76 = sphi 0, %s60
    %s80 = sphi 0, %s80
    %s82 = sphi 0, %s80
    %s83 = sphi 0, %s82
    %s97 = sphi 0, %s83
    %s101 = sphi 0, %s101
    %s103 = sphi 0, %s101
    %s104 = sphi 0, %s103
    %s118 = sphi 0, %s104
    %s122 = sphi 0, %s122
    %s124 = sphi 0, %s122
    %s125 = sphi 0, %s124
    %s139 = sphi 0, %s125
    %s143 = sphi 0, %s143
    %s145 = sphi 0, %s143
    %s146 = sphi 0, %s145
    %s160 = sphi 0, %s146
    %s164 = sphi 0, %s164
    %s166 = sphi 0, %s164
    %s167 = sphi 0, %s166
    %s181 = sphi 0, %s167
    %s185 = sphi 0, %s185
    %s187 = sphi 0, %s185
    %s188 = sphi 0, %s187
    %s202 = sphi 0, %s188
    %s206 = sphi 0, %s206
    %s208 = sphi 0, %s206
    %s209 = sphi 0, %s208
    %s223 = sphi 0, %s209
    %s227 = sphi 0, %s227
    %s229 = sphi 0, %s227
    %s230 = sphi 0, %s229
    %s244 = sphi 0, %s230
    %s248 = sphi 0, %s248
    %s250 = sphi 0, %s248
    %s251 = sphi 0, %s250
    %s265 = sphi 0, %s251
    %s269 = sphi 0, %s269
    %s271 = sphi 0, %s269
    %s272 = sphi 0, %s271
    %s286 = sphi 0, %s272
    %s292 = sphi 0, %s294
    %s295 = sphi 0, %s292
    %s296 = sphi 0, %s295
    %s312 = sphi 0, %s296
    %s318 = sphi 0, %s320
    %s321 = sphi 0, %s318
    %s322 = sphi 0, %s321
    %s338 = sphi 0, %s322
  $region4: #{gnn_ebm_layer_forward.1} parent=0 // loop_header_branch
    %23 = sbr.rel (%p21) target = $region8
  $region5: #{gnn_ebm_layer_forward.1} parent=0 // loop_body
    %s25 = ssub.s32 %s20, 1
    %s26 = ssub.s32 %s20, 2
    %s27 = sadd.s32 %s20, 1
    %s28 = ssub.s32 %s20, %s27
    %p29 = scmp.eq.s32.totalorder %s28, 0
    %s31 = sadd.s32 %s30, 1
    %s32 = scalar_select %p29, %s30, %s31
    %p35 = pneg %p29
    %p36 = scmp.eq.s32.totalorder %s20, 1
    %p37 = por %p35, %p36
    %p38 = scmp.ne.s32.totalorder %s30, %s33
    %p39 = scmp.eq.s32.totalorder %s20, 0
    %p40 = por %p38, %p39
    %p41 = scmp.ne.s32.totalorder %s30, %s33
    %p42 = scmp.eq.s32.totalorder %s25, 1
    %p43 = por %p41, %p42
    %p44 = scmp.ne.s32.totalorder %s33, %s34
    %p45 = scmp.eq.s32.totalorder %s25, 0
    %p46 = por %p44, %p45
    %p47 = scmp.ne.s32.totalorder %s33, %s34
    %p48 = scmp.eq.s32.totalorder %s26, 1
    %p49 = por %p47, %p48
    %p51 = scmp.ne.s32.totalorder %s34, %s50
    %p52 = scmp.eq.s32.totalorder %s26, 0
    %p53 = por %p51, %p52
    %s54 = ssub.s32 %s20, %s27
    %p55 = scmp.eq.s32.totalorder %s54, 0
    %s57 = sadd.s32 %s56, 1
    %s58 = scalar_select %p55, %s56, %s57
    %p61 = pneg %p55
    %p62 = scmp.eq.s32.totalorder %s20, 1
    %p63 = por %p61, %p62
    %p64 = scmp.ne.s32.totalorder %s56, %s59
    %p65 = scmp.eq.s32.totalorder %s20, 0
    %p66 = por %p64, %p65
    %p67 = scmp.ne.s32.totalorder %s56, %s59
    %p68 = scmp.eq.s32.totalorder %s25, 1
    %p69 = por %p67, %p68
    %p70 = scmp.ne.s32.totalorder %s59, %s60
    %p71 = scmp.eq.s32.totalorder %s25, 0
    %p72 = por %p70, %p71
    %p73 = scmp.ne.s32.totalorder %s59, %s60
    %p74 = scmp.eq.s32.totalorder %s26, 1
    %p75 = por %p73, %p74
    %p77 = scmp.ne.s32.totalorder %s60, %s76
    %p78 = scmp.eq.s32.totalorder %s26, 0
    %p79 = por %p77, %p78
    %s81 = sadd.s32 %s80, 1
    %p84 = scmp.eq.s32.totalorder %s20, 1
    %p85 = scmp.ne.s32.totalorder %s80, %s82
    %p86 = scmp.eq.s32.totalorder %s20, 0
    %p87 = por %p85, %p86
    %p88 = scmp.ne.s32.totalorder %s80, %s82
    %p89 = scmp.eq.s32.totalorder %s25, 1
    %p90 = por %p88, %p89
    %p91 = scmp.ne.s32.totalorder %s82, %s83
    %p92 = scmp.eq.s32.totalorder %s25, 0
    %p93 = por %p91, %p92
    %p94 = scmp.ne.s32.totalorder %s82, %s83
    %p95 = scmp.eq.s32.totalorder %s26, 1
    %p96 = por %p94, %p95
    %p98 = scmp.ne.s32.totalorder %s83, %s97
    %p99 = scmp.eq.s32.totalorder %s26, 0
    %p100 = por %p98, %p99
    %s102 = sadd.s32 %s101, 1
    %p105 = scmp.eq.s32.totalorder %s20, 1
    %p106 = scmp.ne.s32.totalorder %s101, %s103
    %p107 = scmp.eq.s32.totalorder %s20, 0
    %p108 = por %p106, %p107
    %p109 = scmp.ne.s32.totalorder %s101, %s103
    %p110 = scmp.eq.s32.totalorder %s25, 1
    %p111 = por %p109, %p110
    %p112 = scmp.ne.s32.totalorder %s103, %s104
    %p113 = scmp.eq.s32.totalorder %s25, 0
    %p114 = por %p112, %p113
    %p115 = scmp.ne.s32.totalorder %s103, %s104
    %p116 = scmp.eq.s32.totalorder %s26, 1
    %p117 = por %p115, %p116
    %p119 = scmp.ne.s32.totalorder %s104, %s118
    %p120 = scmp.eq.s32.totalorder %s26, 0
    %p121 = por %p119, %p120
    %s123 = sadd.s32 %s122, 1
    %p126 = scmp.eq.s32.totalorder %s20, 1
    %p127 = scmp.ne.s32.totalorder %s122, %s124
    %p128 = scmp.eq.s32.totalorder %s20, 0
    %p129 = por %p127, %p128
    %p130 = scmp.ne.s32.totalorder %s122, %s124
    %p131 = scmp.eq.s32.totalorder %s25, 1
    %p132 = por %p130, %p131
    %p133 = scmp.ne.s32.totalorder %s124, %s125
    %p134 = scmp.eq.s32.totalorder %s25, 0
    %p135 = por %p133, %p134
    %p136 = scmp.ne.s32.totalorder %s124, %s125
    %p137 = scmp.eq.s32.totalorder %s26, 1
    %p138 = por %p136, %p137
    %p140 = scmp.ne.s32.totalorder %s125, %s139
    %p141 = scmp.eq.s32.totalorder %s26, 0
    %p142 = por %p140, %p141
    %s144 = sadd.s32 %s143, 1
    %p147 = scmp.eq.s32.totalorder %s20, 1
    %p148 = scmp.ne.s32.totalorder %s143, %s145
    %p149 = scmp.eq.s32.totalorder %s20, 0
    %p150 = por %p148, %p149
    %p151 = scmp.ne.s32.totalorder %s143, %s145
    %p152 = scmp.eq.s32.totalorder %s25, 1
    %p153 = por %p151, %p152
    %p154 = scmp.ne.s32.totalorder %s145, %s146
    %p155 = scmp.eq.s32.totalorder %s25, 0
    %p156 = por %p154, %p155
    %p157 = scmp.ne.s32.totalorder %s145, %s146
    %p158 = scmp.eq.s32.totalorder %s26, 1
    %p159 = por %p157, %p158
    %p161 = scmp.ne.s32.totalorder %s146, %s160
    %p162 = scmp.eq.s32.totalorder %s26, 0
    %p163 = por %p161, %p162
    %s165 = sadd.s32 %s164, 1
    %p168 = scmp.eq.s32.totalorder %s20, 1
    %p169 = scmp.ne.s32.totalorder %s164, %s166
    %p170 = scmp.eq.s32.totalorder %s20, 0
    %p171 = por %p169, %p170
    %p172 = scmp.ne.s32.totalorder %s164, %s166
    %p173 = scmp.eq.s32.totalorder %s25, 1
    %p174 = por %p172, %p173
    %p175 = scmp.ne.s32.totalorder %s166, %s167
    %p176 = scmp.eq.s32.totalorder %s25, 0
    %p177 = por %p175, %p176
    %p178 = scmp.ne.s32.totalorder %s166, %s167
    %p179 = scmp.eq.s32.totalorder %s26, 1
    %p180 = por %p178, %p179
    %p182 = scmp.ne.s32.totalorder %s167, %s181
    %p183 = scmp.eq.s32.totalorder %s26, 0
    %p184 = por %p182, %p183
    %s186 = sadd.s32 %s185, 1
    %p189 = scmp.eq.s32.totalorder %s20, 1
    %p190 = scmp.ne.s32.totalorder %s185, %s187
    %p191 = scmp.eq.s32.totalorder %s20, 0
    %p192 = por %p190, %p191
    %p193 = scmp.ne.s32.totalorder %s185, %s187
    %p194 = scmp.eq.s32.totalorder %s25, 1
    %p195 = por %p193, %p194
    %p196 = scmp.ne.s32.totalorder %s187, %s188
    %p197 = scmp.eq.s32.totalorder %s25, 0
    %p198 = por %p196, %p197
    %p199 = scmp.ne.s32.totalorder %s187, %s188
    %p200 = scmp.eq.s32.totalorder %s26, 1
    %p201 = por %p199, %p200
    %p203 = scmp.ne.s32.totalorder %s188, %s202
    %p204 = scmp.eq.s32.totalorder %s26, 0
    %p205 = por %p203, %p204
    %s207 = sadd.s32 %s206, 1
    %p210 = scmp.eq.s32.totalorder %s20, 1
    %p211 = scmp.ne.s32.totalorder %s206, %s208
    %p212 = scmp.eq.s32.totalorder %s20, 0
    %p213 = por %p211, %p212
    %p214 = scmp.ne.s32.totalorder %s206, %s208
    %p215 = scmp.eq.s32.totalorder %s25, 1
    %p216 = por %p214, %p215
    %p217 = scmp.ne.s32.totalorder %s208, %s209
    %p218 = scmp.eq.s32.totalorder %s25, 0
    %p219 = por %p217, %p218
    %p220 = scmp.ne.s32.totalorder %s208, %s209
    %p221 = scmp.eq.s32.totalorder %s26, 1
    %p222 = por %p220, %p221
    %p224 = scmp.ne.s32.totalorder %s209, %s223
    %p225 = scmp.eq.s32.totalorder %s26, 0
    %p226 = por %p224, %p225
    %s228 = sadd.s32 %s227, 1
    %p231 = scmp.eq.s32.totalorder %s20, 1
    %p232 = scmp.ne.s32.totalorder %s227, %s229
    %p233 = scmp.eq.s32.totalorder %s20, 0
    %p234 = por %p232, %p233
    %p235 = scmp.ne.s32.totalorder %s227, %s229
    %p236 = scmp.eq.s32.totalorder %s25, 1
    %p237 = por %p235, %p236
    %p238 = scmp.ne.s32.totalorder %s229, %s230
    %p239 = scmp.eq.s32.totalorder %s25, 0
    %p240 = por %p238, %p239
    %p241 = scmp.ne.s32.totalorder %s229, %s230
    %p242 = scmp.eq.s32.totalorder %s26, 1
    %p243 = por %p241, %p242
    %p245 = scmp.ne.s32.totalorder %s230, %s244
    %p246 = scmp.eq.s32.totalorder %s26, 0
    %p247 = por %p245, %p246
    %s249 = sadd.s32 %s248, 1
    %p252 = scmp.eq.s32.totalorder %s20, 1
    %p253 = scmp.ne.s32.totalorder %s248, %s250
    %p254 = scmp.eq.s32.totalorder %s20, 0
    %p255 = por %p253, %p254
    %p256 = scmp.ne.s32.totalorder %s248, %s250
    %p257 = scmp.eq.s32.totalorder %s25, 1
    %p258 = por %p256, %p257
    %p259 = scmp.ne.s32.totalorder %s250, %s251
    %p260 = scmp.eq.s32.totalorder %s25, 0
    %p261 = por %p259, %p260
    %p262 = scmp.ne.s32.totalorder %s250, %s251
    %p263 = scmp.eq.s32.totalorder %s26, 1
    %p264 = por %p262, %p263
    %p266 = scmp.ne.s32.totalorder %s251, %s265
    %p267 = scmp.eq.s32.totalorder %s26, 0
    %p268 = por %p266, %p267
    %s270 = sadd.s32 %s269, 1
    %p273 = scmp.eq.s32.totalorder %s20, 1
    %p274 = scmp.ne.s32.totalorder %s269, %s271
    %p275 = scmp.eq.s32.totalorder %s20, 0
    %p276 = por %p274, %p275
    %p277 = scmp.ne.s32.totalorder %s269, %s271
    %p278 = scmp.eq.s32.totalorder %s25, 1
    %p279 = por %p277, %p278
    %p280 = scmp.ne.s32.totalorder %s271, %s272
    %p281 = scmp.eq.s32.totalorder %s25, 0
    %p282 = por %p280, %p281
    %p283 = scmp.ne.s32.totalorder %s271, %s272
    %p284 = scmp.eq.s32.totalorder %s26, 1
    %p285 = por %p283, %p284
    %p287 = scmp.ne.s32.totalorder %s272, %s286
    %p288 = scmp.eq.s32.totalorder %s26, 0
    %p289 = por %p287, %p288
    %s290 = ssub.s32 %s20, %s27
    %p291 = scmp.eq.s32.totalorder %s290, 0
    %s293 = sadd.s32 %s292, 1
    %s294 = scalar_select %p291, %s292, %s293
    %p297 = pneg %p291
    %p298 = scmp.eq.s32.totalorder %s20, 1
    %p299 = por %p297, %p298
    %p300 = scmp.ne.s32.totalorder %s292, %s295
    %p301 = scmp.eq.s32.totalorder %s20, 0
    %p302 = por %p300, %p301
    %p303 = scmp.ne.s32.totalorder %s292, %s295
    %p304 = scmp.eq.s32.totalorder %s25, 1
    %p305 = por %p303, %p304
    %p306 = scmp.ne.s32.totalorder %s295, %s296
    %p307 = scmp.eq.s32.totalorder %s25, 0
    %p308 = por %p306, %p307
    %p309 = scmp.ne.s32.totalorder %s295, %s296
    %p310 = scmp.eq.s32.totalorder %s26, 1
    %p311 = por %p309, %p310
    %p313 = scmp.ne.s32.totalorder %s296, %s312
    %p314 = scmp.eq.s32.totalorder %s26, 0
    %p315 = por %p313, %p314
    %s316 = ssub.s32 %s20, %s27
    %p317 = scmp.eq.s32.totalorder %s316, 0
    %s319 = sadd.s32 %s318, 1
    %s320 = scalar_select %p317, %s318, %s319
    %p323 = pneg %p317
    %p324 = scmp.eq.s32.totalorder %s20, 1
    %p325 = por %p323, %p324
    %p326 = scmp.ne.s32.totalorder %s318, %s321
    %p327 = scmp.eq.s32.totalorder %s20, 0
    %p328 = por %p326, %p327
    %p329 = scmp.ne.s32.totalorder %s318, %s321
    %p330 = scmp.eq.s32.totalorder %s25, 1
    %p331 = por %p329, %p330
    %p332 = scmp.ne.s32.totalorder %s321, %s322
    %p333 = scmp.eq.s32.totalorder %s25, 0
    %p334 = por %p332, %p333
    %p335 = scmp.ne.s32.totalorder %s321, %s322
    %p336 = scmp.eq.s32.totalorder %s26, 1
    %p337 = por %p335, %p336
    %p339 = scmp.ne.s32.totalorder %s322, %s338
    %p340 = scmp.eq.s32.totalorder %s26, 0
    %p341 = por %p339, %p340
    %p342 = scmp.le.s32.totalorder 1, %s20
    %p343 = scmp.lt.s32.totalorder %s20, 3
    %p344 = pnand %p342, %p343
    %p345 = pneg %p344
    // Predicated region
    $region9: #{gnn_ebm_layer_forward.1} parent=5 // pred_check
      _
    $region10: #{gnn_ebm_layer_forward.1} parent=5 // pred_check_branch
      %347 = sbr.rel (%p344) target = $region12
    $region11: #{gnn_ebm_layer_forward.1} parent=5 // pred_region
      %s348 = ssub.s32 %s20, 1
      // Predicated region
      $region13: #{gnn_ebm_layer_forward.1} parent=11 // pred_check
        %p349 = pneg %p93
      $region14: #{gnn_ebm_layer_forward.1} parent=11 // pred_check_branch
        %351 = sbr.rel (%p349) target = $region16
      $region15: #{gnn_ebm_layer_forward.1} parent=11 // pred_region
        _
      $region16: #{gnn_ebm_layer_forward.1} parent=11 // pred_fallthru
        _
      // Predicated region
      $region17: #{gnn_ebm_layer_forward.1} parent=11 // pred_check
        %p352 = pneg %p114
      $region18: #{gnn_ebm_layer_forward.1} parent=11 // pred_check_branch
        %354 = sbr.rel (%p352) target = $region20
      $region19: #{gnn_ebm_layer_forward.1} parent=11 // pred_region
        _
      $region20: #{gnn_ebm_layer_forward.1} parent=11 // pred_fallthru
        _
      // Predicated region
      $region21: #{gnn_ebm_layer_forward.1} parent=11 // pred_check
        %p355 = pneg %p135
      $region22: #{gnn_ebm_layer_forward.1} parent=11 // pred_check_branch
        %357 = sbr.rel (%p355) target = $region24
      $region23: #{gnn_ebm_layer_forward.1} parent=11 // pred_region
        _
      $region24: #{gnn_ebm_layer_forward.1} parent=11 // pred_fallthru
        _
      // Predicated region
      $region25: #{gnn_ebm_layer_forward.1} parent=11 // pred_check
        %p358 = pneg %p156
      $region26: #{gnn_ebm_layer_forward.1} parent=11 // pred_check_branch
        %360 = sbr.rel (%p358) target = $region28
      $region27: #{gnn_ebm_layer_forward.1} parent=11 // pred_region
        _
      $region28: #{gnn_ebm_layer_forward.1} parent=11 // pred_fallthru
        _
      // Predicated region
      $region29: #{gnn_ebm_layer_forward.1} parent=11 // pred_check
        %p361 = pneg %p177
      $region30: #{gnn_ebm_layer_forward.1} parent=11 // pred_check_branch
        %363 = sbr.rel (%p361) target = $region32
      $region31: #{gnn_ebm_layer_forward.1} parent=11 // pred_region
        _
      $region32: #{gnn_ebm_layer_forward.1} parent=11 // pred_fallthru
        _
      // Predicated region
      $region33: #{gnn_ebm_layer_forward.1} parent=11 // pred_check
        %p364 = pneg %p198
      $region34: #{gnn_ebm_layer_forward.1} parent=11 // pred_check_branch
        %366 = sbr.rel (%p364) target = $region36
      $region35: #{gnn_ebm_layer_forward.1} parent=11 // pred_region
        _
      $region36: #{gnn_ebm_layer_forward.1} parent=11 // pred_fallthru
        _
      // Predicated region
      $region37: #{gnn_ebm_layer_forward.1} parent=11 // pred_check
        %p367 = pneg %p219
      $region38: #{gnn_ebm_layer_forward.1} parent=11 // pred_check_branch
        %369 = sbr.rel (%p367) target = $region40
      $region39: #{gnn_ebm_layer_forward.1} parent=11 // pred_region
        _
      $region40: #{gnn_ebm_layer_forward.1} parent=11 // pred_fallthru
        _
      // Predicated region
      $region41: #{gnn_ebm_layer_forward.1} parent=11 // pred_check
        %p370 = pneg %p240
      $region42: #{gnn_ebm_layer_forward.1} parent=11 // pred_check_branch
        %372 = sbr.rel (%p370) target = $region44
      $region43: #{gnn_ebm_layer_forward.1} parent=11 // pred_region
        _
      $region44: #{gnn_ebm_layer_forward.1} parent=11 // pred_fallthru
        _
      // Predicated region
      $region45: #{gnn_ebm_layer_forward.1} parent=11 // pred_check
        %p373 = pneg %p261
      $region46: #{gnn_ebm_layer_forward.1} parent=11 // pred_check_branch
        %375 = sbr.rel (%p373) target = $region48
      $region47: #{gnn_ebm_layer_forward.1} parent=11 // pred_region
        _
      $region48: #{gnn_ebm_layer_forward.1} parent=11 // pred_fallthru
        _
      // Predicated region
      $region49: #{gnn_ebm_layer_forward.1} parent=11 // pred_check
        %p376 = pneg %p282
      $region50: #{gnn_ebm_layer_forward.1} parent=11 // pred_check_branch
        %378 = sbr.rel (%p376) target = $region52
      $region51: #{gnn_ebm_layer_forward.1} parent=11 // pred_region
        _
      $region52: #{gnn_ebm_layer_forward.1} parent=11 // pred_fallthru
        _
    $region12: #{gnn_ebm_layer_forward.1} parent=5 // pred_fallthru
      _
    %p379 = scmp.lt.s32.totalorder %s20, 2
    // Predicated region
    $region53: #{gnn_ebm_layer_forward.1} parent=5 // pred_check
      %p380 = pneg %p379
    $region54: #{gnn_ebm_layer_forward.1} parent=5 // pred_check_branch
      %382 = sbr.rel (%p380) target = $region56
    $region55: #{gnn_ebm_layer_forward.1} parent=5 // pred_region
      // Predicated region
      $region57: #{gnn_ebm_layer_forward.1} parent=55 // pred_check
        %p383 = pneg %p40
      $region58: #{gnn_ebm_layer_forward.1} parent=55 // pred_check_branch
        %385 = sbr.rel (%p383) target = $region60
      $region59: #{gnn_ebm_layer_forward.1} parent=55 // pred_region
        %p386 = scmp.lt.s32.totalorder %s20, 1
        %s387 = scalar_select %p386, %s20, 1
        %s388 = smul.addr %s387, 8
        %s389 = scalar_lea.vmem %s0, %s388
      $region60: #{gnn_ebm_layer_forward.1} parent=55 // pred_fallthru
        _
      // Predicated region
      $region61: #{gnn_ebm_layer_forward.1} parent=55 // pred_check
        %p390 = pneg %p66
      $region62: #{gnn_ebm_layer_forward.1} parent=55 // pred_check_branch
        %392 = sbr.rel (%p390) target = $region64
      $region63: #{gnn_ebm_layer_forward.1} parent=55 // pred_region
        %p393 = scmp.lt.s32.totalorder %s20, 1
        %s394 = scalar_select %p393, %s20, 1
        %s395 = smul.addr %s394, 2
        %s396 = smul.addr %s395, 8
        %s397 = scalar_lea.vmem %s1, %s396
      $region64: #{gnn_ebm_layer_forward.1} parent=55 // pred_fallthru
        _
    $region56: #{gnn_ebm_layer_forward.1} parent=5 // pred_fallthru
      _
    %p398 = scmp.le.s32.totalorder 1, %s20
    %p399 = scmp.lt.s32.totalorder %s20, 3
    %p400 = pnand %p398, %p399
    %p401 = pneg %p400
    // Predicated region
    $region65: #{gnn_ebm_layer_forward.1} parent=5 // pred_check
      _
    $region66: #{gnn_ebm_layer_forward.1} parent=5 // pred_check_branch
      %403 = sbr.rel (%p400) target = $region68
    $region67: #{gnn_ebm_layer_forward.1} parent=5 // pred_region
      %s404 = ssub.s32 %s20, 1
      %p405 = scmp.lt.s32.totalorder %s25, 1
      %s406 = scalar_select %p405, %s25, 1
      %s407 = smul.addr %s406, 8
      %s408 = scalar_lea.vmem %s0, %s407
      %p409 = pneg %p46
      %p410 = pneg %p43
      %p411 = scmp.lt.s32.totalorder %s25, 1
      %s412 = scalar_select %p411, %s25, 1
      %s413 = smul.addr %s412, 2
      %s414 = smul.addr %s413, 8
      %s415 = scalar_lea.vmem %s1, %s414
      %p416 = pneg %p72
      %p417 = pneg %p69
      %p418 = pneg %p93
      %p419 = pneg %p90
      %p420 = pneg %p114
      %p421 = pneg %p111
      %p422 = pneg %p135
      %p423 = pneg %p132
      %p424 = pneg %p156
      %p425 = pneg %p153
      %p426 = pneg %p177
      %p427 = pneg %p174
      %p428 = pneg %p198
      %p429 = pneg %p195
      %p430 = pneg %p219
      %p431 = pneg %p216
      %p432 = pneg %p240
      %p433 = pneg %p237
      %p434 = pneg %p261
      %p435 = pneg %p258
      %p436 = pneg %p282
      %p437 = pneg %p279
      %p438 = pneg %p308
      %p439 = pneg %p305
      %p440 = scmp.lt.s32.totalorder %s25, 1
      %s441 = scalar_select %p440, %s25, 1
      %s442 = smul.addr %s441, 8
      %s443 = scalar_lea.vmem %s12, %s442
      %p444 = pneg %p334
      %p445 = pneg %p331
      %p446 = scmp.lt.s32.totalorder %s25, 1
      %s447 = scalar_select %p446, %s25, 1
      %s448 = smul.addr %s447, 2
      %s449 = smul.addr %s448, 8
      %s450 = scalar_lea.vmem %s13, %s449
      %p451 = scmp.lt.s32.totalorder %s25, 1
      %s452 = scalar_select %p451, %s25, 1
      %s453 = smul.addr %s452, 8
      %s454 = scalar_lea.vmem %s0, %s453
      %p455 = scmp.lt.s32.totalorder %s25, 1
      %s456 = scalar_select %p455, %s25, 1
      %s457 = smul.addr %s456, 2
      %s458 = smul.addr %s457, 8
      %s459 = scalar_lea.vmem %s1, %s458
      %p460 = scmp.lt.s32.totalorder %s25, 1
      %s461 = scalar_select %p460, %s25, 1
      %s462 = smul.addr %s461, 8
      %s463 = scalar_lea.vmem %s12, %s462
      %p464 = scmp.lt.s32.totalorder %s25, 1
      %s465 = scalar_select %p464, %s25, 1
      %s466 = smul.addr %s465, 2
      %s467 = smul.addr %s466, 8
      %s468 = scalar_lea.vmem %s13, %s467
      %v469 = vld [vmem:[%s454] sm:$0xff]
      %v470 = vld [vmem:[%s459] sm:$0xff]
      %v471 = vld [vmem:[%s459 + $0x8] sm:$0xf]
      %v472 = vld [vmem:[%s2] sm:$0xff]
      %vm473 = vcmask 97280
      %v475 = vsel %vm473, %v472, 0
      %vm477 = vcmask 1043456
      %v479 = vsel %vm477, %v471, 0
      %481 = vmatpush.msra.mxu0 0.0
      %482 = vmatpush.msra.mxu0 0.0
      %483 = vmatpush.msra.mxu0 0.0
      %484 = vmatpush.msra.mxu0 0.0
      %485 = vmatpush.msra.mxu0 0.0
      %486 = vmatpush.msra.mxu0 0.0
      %487 = vmatpush.msra.mxu0 0.0
      %488 = vmatpush.msra.mxu0 0.0
      %489 = vmatpush.msra.mxu0 0.0
      %490 = vmatpush.msra.mxu0 0.0
      %491 = vmatpush.msra.mxu0 0.0
      %492 = vmatpush.msra.mxu0 0.0
      %493 = vmatpush.msra.mxu0 0.0
      %494 = vmatpush.msra.mxu0 0.0
      %495 = vmatpush.msra.mxu0 %v479
      %496 = vmatpush.msra.mxu0 %v470
      %497 = vmatmul.f32.gmra.mxu0 %v475
      %v498 = vpop.f32.mrf.mxu0
      %v499 = vadd.f32 0.0, %v498
      %500 = vdwg.mxu0
      %v501 = vld [vmem:[%s5] sm:$0xff]
      %v502 = vld [vmem:[%s5 + $0x8] sm:$0xff]
      %v503 = vld [vmem:[%s5 + $0x10] sm:$0xff]
      %v504 = vld [vmem:[%s5 + $0x18] sm:$0xff]
      %v505 = vld [vmem:[%s5 + $0x20] sm:$0xff]
      %v506 = vld [vmem:[%s5 + $0x28] sm:$0xff]
      %v507 = vld [vmem:[%s5 + $0x30] sm:$0xff]
      %v508 = vld [vmem:[%s5 + $0x38] sm:$0xff]
      %v509 = vld [vmem:[%s6] sm:$0xff]
      %v510 = vld [vmem:[%s6 + $0x8] sm:$0xff]
      %v511 = vld [vmem:[%s6 + $0x10] sm:$0xff]
      %v512 = vld [vmem:[%s6 + $0x18] sm:$0xff]
      %v513 = vld [vmem:[%s6 + $0x20] sm:$0xff]
      %v514 = vld [vmem:[%s6 + $0x28] sm:$0xff]
      %v515 = vld [vmem:[%s6 + $0x30] sm:$0xff]
      %v516 = vld [vmem:[%s6 + $0x38] sm:$0xff]
      %v517 = vld [vmem:[%s6 + $0x40] sm:$0xff]
      %v518 = vld [vmem:[%s6 + $0x48] sm:$0xff]
      %v519 = vld [vmem:[%s6 + $0x50] sm:$0xff]
      %v520 = vld [vmem:[%s6 + $0x58] sm:$0xff]
      %v521 = vld [vmem:[%s6 + $0x60] sm:$0xff]
      %v522 = vld [vmem:[%s6 + $0x68] sm:$0xff]
      %v523 = vld [vmem:[%s6 + $0x70] sm:$0xff]
      %v524 = vld [vmem:[%s6 + $0x78] sm:$0xff]
      %525 = vmatpush.msra.mxu0 %v524
      %526 = vmatpush.msra.mxu0 %v523
      %527 = vmatpush.msra.mxu0 %v522
      %528 = vmatpush.msra.mxu0 %v521
      %529 = vmatpush.msra.mxu0 %v520
      %530 = vmatpush.msra.mxu0 %v519
      %531 = vmatpush.msra.mxu0 %v518
      %532 = vmatpush.msra.mxu0 %v517
      %533 = vmatpush.msra.mxu0 %v516
      %534 = vmatpush.msra.mxu0 %v515
      %535 = vmatpush.msra.mxu0 %v514
      %536 = vmatpush.msra.mxu0 %v513
      %537 = vmatpush.msra.mxu0 %v512
      %538 = vmatpush.msra.mxu0 %v511
      %539 = vmatpush.msra.mxu0 %v510
      %540 = vmatpush.msra.mxu0 %v509
      %541 = vmatmul.f32.gmra.mxu0 %v499
      %v542 = vpop.f32.mrf.mxu0
      %v543 = vadd.f32 0.0, %v542
      %544 = vdwg.mxu0
      %vm545 = vcmask 523264
      %v547 = vsel %vm545, %v469, 0
      %549 = vmatpush.msra.mxu0 0.0
      %550 = vmatpush.msra.mxu0 0.0
      %551 = vmatpush.msra.mxu0 0.0
      %552 = vmatpush.msra.mxu0 0.0
      %553 = vmatpush.msra.mxu0 0.0
      %554 = vmatpush.msra.mxu0 0.0
      %555 = vmatpush.msra.mxu0 0.0
      %556 = vmatpush.msra.mxu0 0.0
      %557 = vmatpush.msra.mxu0 %v508
      %558 = vmatpush.msra.mxu0 %v507
      %559 = vmatpush.msra.mxu0 %v506
      %560 = vmatpush.msra.mxu0 %v505
      %561 = vmatpush.msra.mxu0 %v504
      %562 = vmatpush.msra.mxu0 %v503
      %563 = vmatpush.msra.mxu0 %v502
      %564 = vmatpush.msra.mxu0 %v501
      %565 = vmatmul.f32.gmra.mxu0 %v547
      %v566 = vpop.f32.mrf.mxu0
      %v567 = vadd.f32 %v543, %v566
      %568 = vdwg.mxu0
      %v569 = vld [vmem:[%s7] sm:$0x1]
      %v571 = vperm.slane %v569, 0
      %v573 = vadd.f32 %v567, %v571
      %574 = vst.msk [vmem:[%s463] sm:$0xff] %vm545, %v573
      %v575 = vld [vmem:[%s9] sm:$0xff]
      %v576 = vld [vmem:[%s9 + $0x8] sm:$0xff]
      %v577 = vld [vmem:[%s9 + $0x10] sm:$0xff]
      %v578 = vld [vmem:[%s9 + $0x18] sm:$0xff]
      %v579 = vld [vmem:[%s9 + $0x20] sm:$0xff]
      %v580 = vld [vmem:[%s9 + $0x28] sm:$0xff]
      %v581 = vld [vmem:[%s9 + $0x30] sm:$0xff]
      %v582 = vld [vmem:[%s9 + $0x38] sm:$0xff]
      %583 = vmatpush.msra.mxu0 0.0
      %584 = vmatpush.msra.mxu0 0.0
      %585 = vmatpush.msra.mxu0 0.0
      %586 = vmatpush.msra.mxu0 0.0
      %587 = vmatpush.msra.mxu0 0.0
      %588 = vmatpush.msra.mxu0 0.0
      %589 = vmatpush.msra.mxu0 0.0
      %590 = vmatpush.msra.mxu0 0.0
      %591 = vmatpush.msra.mxu0 %v582
      %592 = vmatpush.msra.mxu0 %v581
      %593 = vmatpush.msra.mxu0 %v580
      %594 = vmatpush.msra.mxu0 %v579
      %595 = vmatpush.msra.mxu0 %v578
      %596 = vmatpush.msra.mxu0 %v577
      %597 = vmatpush.msra.mxu0 %v576
      %598 = vmatpush.msra.mxu0 %v575
      %599 = vmatmul.f32.gmra.mxu0 %v547
      %v600 = vpop.f32.mrf.mxu0
      %v601 = vadd.f32 0.0, %v600
      %602 = vdwg.mxu0
      %v603 = vld [vmem:[%s10] sm:$0xff]
      %v604 = vld [vmem:[%s10 + $0x8] sm:$0xff]
      %v605 = vld [vmem:[%s10 + $0x10] sm:$0xff]
      %v606 = vld [vmem:[%s10 + $0x18] sm:$0xff]
      %v607 = vld [vmem:[%s10 + $0x20] sm:$0xff]
      %v608 = vld [vmem:[%s10 + $0x28] sm:$0xff]
      %v609 = vld [vmem:[%s10 + $0x30] sm:$0xff]
      %v610 = vld [vmem:[%s10 + $0x38] sm:$0xff]
      %611 = vmatpush.msra.mxu0 0.0
      %612 = vmatpush.msra.mxu0 0.0
      %613 = vmatpush.msra.mxu0 0.0
      %614 = vmatpush.msra.mxu0 0.0
      %615 = vmatpush.msra.mxu0 0.0
      %616 = vmatpush.msra.mxu0 0.0
      %617 = vmatpush.msra.mxu0 0.0
      %618 = vmatpush.msra.mxu0 0.0
      %619 = vmatpush.msra.mxu0 %v610
      %620 = vmatpush.msra.mxu0 %v609
      %621 = vmatpush.msra.mxu0 %v608
      %622 = vmatpush.msra.mxu0 %v607
      %623 = vmatpush.msra.mxu0 %v606
      %624 = vmatpush.msra.mxu0 %v605
      %625 = vmatpush.msra.mxu0 %v604
      %626 = vmatpush.msra.mxu0 %v603
      %627 = vmatmul.f32.gmra.mxu0 %v547
      %v628 = vpop.f32.mrf.mxu0
      %v629 = vadd.f32 0.0, %v628
      %630 = vdwg.mxu0
      %v631 = vld [vmem:[%s8] sm:$0xff]
      %v632 = vld [vmem:[%s8 + $0x8] sm:$0xff]
      %v633 = vld [vmem:[%s8 + $0x10] sm:$0xff]
      %v634 = vld [vmem:[%s8 + $0x18] sm:$0xff]
      %v635 = vld [vmem:[%s8 + $0x20] sm:$0xff]
      %v636 = vld [vmem:[%s8 + $0x28] sm:$0xff]
      %v637 = vld [vmem:[%s8 + $0x30] sm:$0xff]
      %v638 = vld [vmem:[%s8 + $0x38] sm:$0xff]
      %v639 = vld [vmem:[%s8 + $0x40] sm:$0xff]
      %v640 = vld [vmem:[%s8 + $0x48] sm:$0xff]
      %v641 = vld [vmem:[%s8 + $0x50] sm:$0xff]
      %v642 = vld [vmem:[%s8 + $0x58] sm:$0xff]
      %v643 = vld [vmem:[%s8 + $0x60] sm:$0xff]
      %v644 = vld [vmem:[%s8 + $0x68] sm:$0xff]
      %v645 = vld [vmem:[%s8 + $0x70] sm:$0xff]
      %v646 = vld [vmem:[%s8 + $0x78] sm:$0xff]
      %v647 = vld [vmem:[%s3] sm:$0xff]
      %v648 = vld [vmem:[%s3 + $0x8] sm:$0xf]
      %vm649 = vcmask 64512
      %v651 = vsel %vm649, %v647, 0
      %v654 = vsel %vm649, %v648, 0
      %656 = vmatpush.msra.mxu0 0.0
      %657 = vmatpush.msra.mxu0 0.0
      %658 = vmatpush.msra.mxu0 0.0
      %659 = vmatpush.msra.mxu0 0.0
      %660 = vmatpush.msra.mxu0 0.0
      %661 = vmatpush.msra.mxu0 0.0
      %662 = vmatpush.msra.mxu0 0.0
      %663 = vmatpush.msra.mxu0 0.0
      %664 = vmatpush.msra.mxu0 0.0
      %665 = vmatpush.msra.mxu0 0.0
      %666 = vmatpush.msra.mxu0 0.0
      %667 = vmatpush.msra.mxu0 0.0
      %668 = vmatpush.msra.mxu0 0.0
      %669 = vmatpush.msra.mxu0 0.0
      %670 = vmatpush.msra.mxu0 0.0
      %671 = vmatpush.msra.mxu0 %v601
      %672 = vmatmul.f32.gmra.mxu0 %v651
      %v673 = vpop.f32.mrf.mxu0
      %v674 = vadd.f32 0.0, %v673
      %675 = vmatmul.f32.gmra.mxu0 %v654
      %v676 = vpop.f32.mrf.mxu0
      %v677 = vadd.f32 0.0, %v676
      %678 = vdwg.mxu0
      %679 = vmatpush.msra.mxu0 %v646
      %680 = vmatpush.msra.mxu0 %v645
      %681 = vmatpush.msra.mxu0 %v644
      %682 = vmatpush.msra.mxu0 %v643
      %683 = vmatpush.msra.mxu0 %v642
      %684 = vmatpush.msra.mxu0 %v641
      %685 = vmatpush.msra.mxu0 %v640
      %686 = vmatpush.msra.mxu0 %v639
      %687 = vmatpush.msra.mxu0 %v638
      %688 = vmatpush.msra.mxu0 %v637
      %689 = vmatpush.msra.mxu0 %v636
      %690 = vmatpush.msra.mxu0 %v635
      %691 = vmatpush.msra.mxu0 %v634
      %692 = vmatpush.msra.mxu0 %v633
      %693 = vmatpush.msra.mxu0 %v632
      %694 = vmatpush.msra.mxu0 %v631
      %695 = vmatmul.f32.gmra.mxu0 %v470
      %v696 = vpop.f32.mrf.mxu0
      %v697 = vadd.f32 %v674, %v696
      %698 = vmatmul.f32.gmra.mxu0 %v471
      %v699 = vpop.f32.mrf.mxu0
      %v700 = vadd.f32 %v677, %v699
      %701 = vdwg.mxu0
      %v702 = vld [vmem:[%s4] sm:$0xff]
      %v703 = vld [vmem:[%s4 + $0x8] sm:$0xf]
      %v705 = vsel %vm649, %v702, 0
      %v708 = vsel %vm649, %v703, 0
      %710 = vmatpush.msra.mxu0 0.0
      %711 = vmatpush.msra.mxu0 0.0
      %712 = vmatpush.msra.mxu0 0.0
      %713 = vmatpush.msra.mxu0 0.0
      %714 = vmatpush.msra.mxu0 0.0
      %715 = vmatpush.msra.mxu0 0.0
      %716 = vmatpush.msra.mxu0 0.0
      %717 = vmatpush.msra.mxu0 0.0
      %718 = vmatpush.msra.mxu0 0.0
      %719 = vmatpush.msra.mxu0 0.0
      %720 = vmatpush.msra.mxu0 0.0
      %721 = vmatpush.msra.mxu0 0.0
      %722 = vmatpush.msra.mxu0 0.0
      %723 = vmatpush.msra.mxu0 0.0
      %724 = vmatpush.msra.mxu0 0.0
      %725 = vmatpush.msra.mxu0 %v629
      %726 = vmatmul.f32.gmra.mxu0 %v705
      %v727 = vpop.f32.mrf.mxu0
      %v728 = vadd.f32 0.0, %v727
      %729 = vmatmul.f32.gmra.mxu0 %v708
      %v730 = vpop.f32.mrf.mxu0
      %v731 = vadd.f32 0.0, %v730
      %732 = vdwg.mxu0
      %v733 = vadd.f32 %v697, %v728
      %v734 = vadd.f32 %v700, %v731
      %v735 = vld [vmem:[%s11] sm:$0x1]
      %v737 = vperm.slane %v735, 0
      %v739 = vadd.f32 %v733, %v737
      %v740 = vadd.f32 %v734, %v737
      %741 = vst [vmem:[%s468] sm:$0xff] %v739
      %742 = vst [vmem:[%s468 + $0x8] sm:$0xf] %v740
      %p743 = scmp.lt.s32.totalorder %s25, 1
      %s744 = scalar_select %p743, %s25, 1
      %s745 = smul.addr %s744, 8
      %s746 = scalar_lea.vmem %s12, %s745
      %p747 = scmp.lt.s32.totalorder %s25, 1
      %s748 = scalar_select %p747, %s25, 1
      %s749 = smul.addr %s748, 2
      %s750 = smul.addr %s749, 8
      %s751 = scalar_lea.vmem %s13, %s750
      // Predicated region
      $region69: #{gnn_ebm_layer_forward.1} parent=67 // pred_check
        %p752 = pneg %p305
      $region70: #{gnn_ebm_layer_forward.1} parent=67 // pred_check_branch
        %754 = sbr.rel (%p752) target = $region72
      $region71: #{gnn_ebm_layer_forward.1} parent=67 // pred_region
        _
      $region72: #{gnn_ebm_layer_forward.1} parent=67 // pred_fallthru
        _
      // Predicated region
      $region73: #{gnn_ebm_layer_forward.1} parent=67 // pred_check
        %p755 = pneg %p331
      $region74: #{gnn_ebm_layer_forward.1} parent=67 // pred_check_branch
        %757 = sbr.rel (%p755) target = $region76
      $region75: #{gnn_ebm_layer_forward.1} parent=67 // pred_region
        _
      $region76: #{gnn_ebm_layer_forward.1} parent=67 // pred_fallthru
        _
    $region68: #{gnn_ebm_layer_forward.1} parent=5 // pred_fallthru
      _
    %p758 = scmp.le.s32.totalorder 2, %s20
    // Predicated region
    $region77: #{gnn_ebm_layer_forward.1} parent=5 // pred_check
      %p759 = pneg %p758
    $region78: #{gnn_ebm_layer_forward.1} parent=5 // pred_check_branch
      %761 = sbr.rel (%p759) target = $region80
    $region79: #{gnn_ebm_layer_forward.1} parent=5 // pred_region
      %s762 = ssub.s32 %s20, 2
      // Predicated region
      $region81: #{gnn_ebm_layer_forward.1} parent=79 // pred_check
        %p763 = pneg %p311
      $region82: #{gnn_ebm_layer_forward.1} parent=79 // pred_check_branch
        %765 = sbr.rel (%p763) target = $region84
      $region83: #{gnn_ebm_layer_forward.1} parent=79 // pred_region
        %p766 = scmp.lt.s32.totalorder %s26, 1
        %s767 = scalar_select %p766, %s26, 1
        %s768 = smul.addr %s767, 8
        %s769 = scalar_lea.vmem %s12, %s768
      $region84: #{gnn_ebm_layer_forward.1} parent=79 // pred_fallthru
        _
      // Predicated region
      $region85: #{gnn_ebm_layer_forward.1} parent=79 // pred_check
        %p770 = pneg %p337
      $region86: #{gnn_ebm_layer_forward.1} parent=79 // pred_check_branch
        %772 = sbr.rel (%p770) target = $region88
      $region87: #{gnn_ebm_layer_forward.1} parent=79 // pred_region
        %p773 = scmp.lt.s32.totalorder %s26, 1
        %s774 = scalar_select %p773, %s26, 1
        %s775 = smul.addr %s774, 2
        %s776 = smul.addr %s775, 8
        %s777 = scalar_lea.vmem %s13, %s776
      $region88: #{gnn_ebm_layer_forward.1} parent=79 // pred_fallthru
        _
    $region80: #{gnn_ebm_layer_forward.1} parent=5 // pred_fallthru
      _
  $region6: #{gnn_ebm_layer_forward.1} parent=0 // loop_footer
    %s24 = sadd.s32 1, %s20
  $region7: #{gnn_ebm_layer_forward.1} parent=0 // loop_footer_branch
    %19 = sbr.rel target = $region3
  $region8: #{gnn_ebm_layer_forward.1} parent=0 // loop_exit
    _

</llo_original>
